<compile_context>
chip_gen: v7x
topology: tpu7x:2x2x1
jax: 0.10.0
libtpu: 0.0.40
codegen_flags: <defaults>
</compile_context>

<pallas_src>
import jax
import jax.numpy as jnp
import numpy as np
from jax.experimental import pallas as pl
from jax.experimental.pallas import tpu as pltpu


def wsdan_kernel(feat_ref, wattn_ref, fm_ref, amap_ref):
    # feat_ref  : (Bt, C, HW)  feature maps (compute dtype; C on sublanes, HW on lanes)
    # wattn_ref : (M, C)       1x1 conv weight, (out_channels, in_channels)
    # fm_ref    : (Bt, M, C)   BAP feature matrix (f32, lane-dense on C)
    # amap_ref  : (Bt, 1, HW)  min-max normalized mean attention map (f32, lane-dense on HW)
    Bt = feat_ref.shape[0]
    HW = feat_ref.shape[2]
    wat = wattn_ref[...]                                              # (M, C), tiny
    inv_hw = jnp.float32(1.0 / HW)

    def body(b, carry):
        fb = feat_ref[b]                                              # (C, HW)

        # attentions: 1x1 conv == (M, C) @ (C, HW).  Both operands are already in MXU-native
        # orientation (lhs contraction last, rhs contraction first) -> no transposes.
        ab = jnp.dot(wat, fb, preferred_element_type=jnp.float32)     # (M, HW), f32 acc

        # BAP with GAP: fm[m, c] = (1/HW) * sum_hw attn[m, hw] * feat[c, hw].
        # The big (C, HW) tile is the LHS with its contraction on the lane dim, so the
        # compiler-inserted transpose hits the small attention tile, and the (C, M) -> (M, C)
        # result transpose is ~HW/M times cheaper than transposing fb through the XLU.
        fm_cm = jax.lax.dot_general(
            fb, ab.astype(fb.dtype),
            dimension_numbers=(((1,), (1,)), ((), ())),
            preferred_element_type=jnp.float32)                       # (C, M)
        fm_ref[b] = (fm_cm.T * inv_hw).astype(fm_ref.dtype)           # (M, C), lane-dense on C

        # eval-mode attention map: mean over M (sublane reduce), then per-sample min-max
        # normalization over HW.  NOTE: matches the PyTorch reference exactly, including the
        # absence of an epsilon guard on (max - min).
        amean = jnp.mean(ab, axis=0, keepdims=True)                   # (1, HW)
        amin = jnp.min(amean, axis=-1, keepdims=True)                 # (1, 1)
        amax = jnp.max(amean, axis=-1, keepdims=True)                 # (1, 1)
        norm = (amean - amin) * pl.reciprocal(amax - amin, approx=True)
        amap_ref[b] = norm.astype(amap_ref.dtype)
        return carry

    # Visible loop (vs a static Python unroll) bounds per-sample live ranges so large batch
    # blocks don't push vreg pressure into spills; unroll=True keeps LLO scheduler visibility.
    jax.lax.fori_loop(0, Bt, body, None, unroll=True)


def wsdan_forward(x_nchw, w_attn, w_fc, b_fc, *, compute_dtype=jnp.bfloat16, block_b=None):
    """x_nchw: (B, C, H, W) backbone feature maps (NCHW, like PyTorch).
       w_attn: (C, M)    = Conv2d(C, M, 1, bias=False).weight transposed
       w_fc  : (M*C, NC) = Linear(M*C, NC).weight transposed
       b_fc  : (NC,)"""
    B, C, H, W = x_nchw.shape
    HW = H * W
    M = w_attn.shape[1]

    # NCHW -> (B, C, HW) is a free reshape (C on sublanes, HW on lanes).  The bf16 cast halves
    # the dominant feat HBM->VMEM traffic; all matmuls still accumulate in f32.
    feat = x_nchw.reshape(B, C, HW).astype(compute_dtype)
    wat = jnp.transpose(w_attn).astype(compute_dtype)                 # (M, C), tiny

    # Generation-aware VMEM budget: ~3/4 of physical VMEM, capped at 100 MiB
    # (-> ~96-100 MiB on v5e/v6e's 128 MiB, ~48 MiB on v7x's 64 MiB per TensorCore).
    try:
        vmem_cap = int(pltpu.get_tpu_info().vmem_capacity_bytes)
    except Exception:  # query unavailable -> conservative v7x-safe fallback
        vmem_cap = 64 * 1024 * 1024
    vmem_budget = min(100 * 1024 * 1024, (3 * vmem_cap) // 4)

    feat_item = jnp.dtype(compute_dtype).itemsize
    f32_item = jnp.dtype(jnp.float32).itemsize
    # Double-buffered feat input + fm / amap outputs, per batch element.
    per_sample = 2 * (C * HW * feat_item + M * C * f32_item + HW * f32_item)

    if block_b is None:
        cap_b = max(1, vmem_budget // per_sample)
        if B <= 1:
            steps = 1
        else:
            # >= 2 grid steps so the "parallel" batch axis shards across v7x's two TensorCores,
            # and an even step count so neither core idles on the tail.
            steps = max(2, -(-B // cap_b))
            if steps % 2:
                steps += 1
            steps = min(steps, B)
        block_b = -(-B // steps)
    grid_b = -(-B // block_b)

    # Pad awkward batch sizes up to a multiple of block_b instead of shrinking the block
    # (padded samples are sliced off below; their NaN attention maps never escape).
    b_pad = grid_b * block_b
    if b_pad != B:
        feat = jnp.pad(feat, ((0, b_pad - B), (0, 0), (0, 0)))

    vmem_limit = int(min(max(vmem_budget, block_b * per_sample + (4 << 20)), vmem_cap))

    fm, amap = pl.pallas_call(
        wsdan_kernel,
        out_shape=(
            jax.ShapeDtypeStruct((b_pad, M, C), jnp.float32),         # feature_matrix
            jax.ShapeDtypeStruct((b_pad, 1, HW), jnp.float32),        # attention_map (lane-dense)
        ),
        grid=(grid_b,),
        in_specs=[
            pl.BlockSpec((block_b, C, HW), lambda b: (b, 0, 0)),
            # TODO(synk): constant-index wat block may be re-DMA'd each grid step; at real WSDAN
            # shapes it is <100 KB, so it is not worth a VMEM-scratch hoist.
            pl.BlockSpec((M, C), lambda b: (0, 0)),
        ],
        out_specs=(
            pl.BlockSpec((block_b, M, C), lambda b: (b, 0, 0)),
            pl.BlockSpec((block_b, 1, HW), lambda b: (b, 0, 0)),
        ),
        compiler_params=pltpu.CompilerParams(
            dimension_semantics=("parallel",),
            vmem_limit_bytes=vmem_limit),
    )(feat, wat)

    fm = fm[:B]
    amap = amap[:B]

    # fc hoisted out of the kernel: one batched (B, M*C) x (M*C, NC) XLA matmul over the whole
    # batch keeps the (possibly ~20 MB) fc weight out of VMEM and uses the MXU efficiently.
    # Flatten order matches torch's feature_matrix.view(B, -1): m-major, c-minor.
    p = fm.reshape(B, M * C).astype(w_fc.dtype) @ w_fc + b_fc

    return p, fm, amap.reshape(B, 1, H, W)


def wsdan_reference(x, w_attn, w_fc, b_fc):
    """Plain-JAX f32 reference with the original NCHW semantics (eval mode)."""
    B, C, H, W = x.shape
    attn = jnp.einsum('bchw,cm->bmhw', x, w_attn)                     # 1x1 conv, no bias
    fm = jnp.einsum('bchw,bmhw->bmc', x, attn) / (H * W)              # BAP (GAP)
    p = fm.reshape(B, -1) @ w_fc + b_fc                               # fc
    am = jnp.mean(attn, axis=1).reshape(B, -1)                        # eval-mode attention map
    am_min = am.min(axis=1, keepdims=True)
    am_max = am.max(axis=1, keepdims=True)
    am = (am - am_min) / (am_max - am_min)
    return p, fm, am.reshape(B, 1, H, W)


if __name__ == "__main__":
    # Small, module-consistent shapes: num_features -> 32, M -> 8, num_classes -> 10.
    B, C, H, W = 4, 32, 8, 8
    M, NC = 8, 10

    key = jax.random.PRNGKey(0)
    k1, k2, k3, k4 = jax.random.split(key, 4)
    x = jax.random.normal(k1, (B, C, H, W), jnp.float32)              # feature maps
    w_attn = jax.random.normal(k2, (C, M), jnp.float32) * 0.1         # Conv2d(C, M, 1).weight^T
    w_fc = jax.random.normal(k3, (M * C, NC), jnp.float32) * 0.05     # Linear(M*C, NC).weight^T
    b_fc = jax.random.normal(k4, (NC,), jnp.float32) * 0.01           # Linear bias

    p, fm, amap = wsdan_forward(x, w_attn, w_fc, b_fc)                # default bf16 compute path
    jax.block_until_ready((p, fm, amap))

    # The reference consumes the same bf16-rounded inputs the kernel sees, so the check isolates
    # kernel correctness from the intended bf16 quantization of the inputs.
    x_q = x.astype(jnp.bfloat16).astype(jnp.float32)
    wa_q = w_attn.astype(jnp.bfloat16).astype(jnp.float32)
    p_ref, fm_ref, amap_ref = wsdan_reference(x_q, wa_q, w_fc, b_fc)

    np.testing.assert_allclose(np.asarray(fm), np.asarray(fm_ref), rtol=1e-2, atol=1e-2)
    np.testing.assert_allclose(np.asarray(p), np.asarray(p_ref), rtol=1e-2, atol=1e-2)
    # amap values are in [0, 1]; the kernel uses the EUP approximate reciprocal.
    np.testing.assert_allclose(np.asarray(amap), np.asarray(amap_ref), rtol=2e-2, atol=2e-2)

    print("KERNEL_OK")
</pallas_src>

<mosaic_0001>
module attributes {stable_mosaic.version = 11 : i64} {
  func.func @wsdan_kernel(%arg0: i32, %arg1: memref<2x32x64xbf16, #tpu.memory_space<vmem>>, %arg2: memref<8x32xbf16, #tpu.memory_space<vmem>>, %arg3: memref<2x8x32xf32, #tpu.memory_space<vmem>>, %arg4: memref<2x1x64xf32, #tpu.memory_space<vmem>>) attributes {dimension_semantics = [#tpu.dimension_semantics<parallel>], iteration_bounds = array<i64: 2>, scalar_prefetch = 0 : i64, scratch_operands = 0 : i64, tpu.core_type = #tpu.core_type<tc>, window_params = [{transform_indices = @transform_0, window_bounds = array<i64: 2, 32, 64>}, {pipeline_mode = #tpu.pipeline_mode<synchronous>, transform_indices = @transform_1, window_bounds = array<i64: 8, 32>}, {transform_indices = @transform_2, window_bounds = array<i64: 2, 8, 32>}, {transform_indices = @transform_3, window_bounds = array<i64: 2, 1, 64>}]} {
    %c0 = arith.constant 0 : index
    %c0_0 = arith.constant 0 : index
    %0 = vector.load %arg2[%c0, %c0_0] : memref<8x32xbf16, #tpu.memory_space<vmem>>, vector<8x32xbf16>
    %cst = arith.constant 1.562500e-02 : f32
    %c0_i32 = arith.constant 0 : i32
    %1 = arith.index_cast %c0_i32 : i32 to index
    %c0_1 = arith.constant 0 : index
    %c0_2 = arith.constant 0 : index
    %2 = vector.load %arg1[%1, %c0_1, %c0_2] : memref<2x32x64xbf16, #tpu.memory_space<vmem>>, vector<1x32x64xbf16>
    %3 = vector.shape_cast %2 : vector<1x32x64xbf16> to vector<32x64xbf16>
    %cst_3 = arith.constant dense<0.000000e+00> : vector<8x64xf32>
    %4 = tpu.matmul %0, %3, %cst_3 {dimension_numbers = #tpu.dot_dimension_numbers<[1], [0], [0], [1], [0, 0, 1, 1], [], []>} : vector<8x32xbf16>, vector<32x64xbf16>, vector<8x64xf32> -> vector<8x64xf32>
    %5 = arith.truncf %4 : vector<8x64xf32> to vector<8x64xbf16>
    %cst_4 = arith.constant dense<0.000000e+00> : vector<32x8xf32>
    %6 = tpu.matmul %3, %5, %cst_4 {dimension_numbers = #tpu.dot_dimension_numbers<[1], [1], [0], [0], [0, 0, 1, 0], [], []>} : vector<32x64xbf16>, vector<8x64xbf16>, vector<32x8xf32> -> vector<32x8xf32>
    %7 = tpu.transpose %6, [1, 0] : vector<32x8xf32> -> vector<8x32xf32>
    %8 = vector.broadcast %cst : f32 to vector<8x32xf32>
    %9 = arith.mulf %7, %8 : vector<8x32xf32>
    %10 = arith.index_cast %c0_i32 : i32 to index
    %c0_5 = arith.constant 0 : index
    %c0_6 = arith.constant 0 : index
    %11 = vector.load %arg3[%10, %c0_5, %c0_6] : memref<2x8x32xf32, #tpu.memory_space<vmem>>, vector<1x8x32xf32>
    %12 = vector.shape_cast %11 : vector<1x8x32xf32> to vector<8x32xf32>
    %13 = vector.shape_cast %9 : vector<8x32xf32> to vector<1x8x32xf32>
    tpu.vector_store %arg3[%10, %c0_5, %c0_6], %13 {strides = array<i32>} : memref<2x8x32xf32, #tpu.memory_space<vmem>>, vector<1x8x32xf32>,
    %cst_7 = arith.constant dense<0.000000e+00> : vector<64xf32>
    %14 = vector.multi_reduction <add>, %4, %cst_7 [0] : vector<8x64xf32> to vector<64xf32>
    %15 = vector.shape_cast %14 : vector<64xf32> to vector<1x64xf32>
    %cst_8 = arith.constant 8.000000e+00 : f32
    %16 = vector.broadcast %cst_8 : f32 to vector<1x64xf32>
    %17 = arith.divf %15, %16 : vector<1x64xf32>
    %cst_9 = arith.constant dense<0x7F800000> : vector<1xf32>
    %18 = vector.multi_reduction <minimumf>, %17, %cst_9 [1] : vector<1x64xf32> to vector<1xf32>
    %19 = vector.shape_cast %18 : vector<1xf32> to vector<1x1xf32>
    %cst_10 = arith.constant dense<0xFF800000> : vector<1xf32>
    %20 = vector.multi_reduction <maximumf>, %17, %cst_10 [1] : vector<1x64xf32> to vector<1xf32>
    %21 = vector.shape_cast %20 : vector<1xf32> to vector<1x1xf32>
    %22 = vector.broadcast %19 : vector<1x1xf32> to vector<1x64xf32>
    %23 = arith.subf %17, %22 : vector<1x64xf32>
    %24 = arith.subf %21, %19 : vector<1x1xf32>
    %25 = tpu.reciprocal %24 {approx = true} : vector<1x1xf32> -> vector<1x1xf32>
    %26 = vector.broadcast %25 : vector<1x1xf32> to vector<1x64xf32>
    %27 = arith.mulf %23, %26 : vector<1x64xf32>
    %28 = arith.index_cast %c0_i32 : i32 to index
    %c0_11 = arith.constant 0 : index
    %c0_12 = arith.constant 0 : index
    %29 = vector.load %arg4[%28, %c0_11, %c0_12] : memref<2x1x64xf32, #tpu.memory_space<vmem>>, vector<1x1x64xf32>
    %30 = vector.shape_cast %29 : vector<1x1x64xf32> to vector<1x64xf32>
    %31 = vector.shape_cast %27 : vector<1x64xf32> to vector<1x1x64xf32>
    tpu.vector_store %arg4[%28, %c0_11, %c0_12], %31 {strides = array<i32>} : memref<2x1x64xf32, #tpu.memory_space<vmem>>, vector<1x1x64xf32>,
    %c1_i32 = arith.constant 1 : i32
    %32 = arith.index_cast %c1_i32 : i32 to index
    %c0_13 = arith.constant 0 : index
    %c0_14 = arith.constant 0 : index
    %33 = vector.load %arg1[%32, %c0_13, %c0_14] : memref<2x32x64xbf16, #tpu.memory_space<vmem>>, vector<1x32x64xbf16>
    %34 = vector.shape_cast %33 : vector<1x32x64xbf16> to vector<32x64xbf16>
    %cst_15 = arith.constant dense<0.000000e+00> : vector<8x64xf32>
    %35 = tpu.matmul %0, %34, %cst_15 {dimension_numbers = #tpu.dot_dimension_numbers<[1], [0], [0], [1], [0, 0, 1, 1], [], []>} : vector<8x32xbf16>, vector<32x64xbf16>, vector<8x64xf32> -> vector<8x64xf32>
    %36 = arith.truncf %35 : vector<8x64xf32> to vector<8x64xbf16>
    %cst_16 = arith.constant dense<0.000000e+00> : vector<32x8xf32>
    %37 = tpu.matmul %34, %36, %cst_16 {dimension_numbers = #tpu.dot_dimension_numbers<[1], [1], [0], [0], [0, 0, 1, 0], [], []>} : vector<32x64xbf16>, vector<8x64xbf16>, vector<32x8xf32> -> vector<32x8xf32>
    %38 = tpu.transpose %37, [1, 0] : vector<32x8xf32> -> vector<8x32xf32>
    %39 = vector.broadcast %cst : f32 to vector<8x32xf32>
    %40 = arith.mulf %38, %39 : vector<8x32xf32>
    %41 = arith.index_cast %c1_i32 : i32 to index
    %c0_17 = arith.constant 0 : index
    %c0_18 = arith.constant 0 : index
    %42 = vector.load %arg3[%41, %c0_17, %c0_18] : memref<2x8x32xf32, #tpu.memory_space<vmem>>, vector<1x8x32xf32>
    %43 = vector.shape_cast %42 : vector<1x8x32xf32> to vector<8x32xf32>
    %44 = vector.shape_cast %40 : vector<8x32xf32> to vector<1x8x32xf32>
    tpu.vector_store %arg3[%41, %c0_17, %c0_18], %44 {strides = array<i32>} : memref<2x8x32xf32, #tpu.memory_space<vmem>>, vector<1x8x32xf32>,
    %cst_19 = arith.constant dense<0.000000e+00> : vector<64xf32>
    %45 = vector.multi_reduction <add>, %35, %cst_19 [0] : vector<8x64xf32> to vector<64xf32>
    %46 = vector.shape_cast %45 : vector<64xf32> to vector<1x64xf32>
    %cst_20 = arith.constant 8.000000e+00 : f32
    %47 = vector.broadcast %cst_20 : f32 to vector<1x64xf32>
    %48 = arith.divf %46, %47 : vector<1x64xf32>
    %cst_21 = arith.constant dense<0x7F800000> : vector<1xf32>
    %49 = vector.multi_reduction <minimumf>, %48, %cst_21 [1] : vector<1x64xf32> to vector<1xf32>
    %50 = vector.shape_cast %49 : vector<1xf32> to vector<1x1xf32>
    %cst_22 = arith.constant dense<0xFF800000> : vector<1xf32>
    %51 = vector.multi_reduction <maximumf>, %48, %cst_22 [1] : vector<1x64xf32> to vector<1xf32>
    %52 = vector.shape_cast %51 : vector<1xf32> to vector<1x1xf32>
    %53 = vector.broadcast %50 : vector<1x1xf32> to vector<1x64xf32>
    %54 = arith.subf %48, %53 : vector<1x64xf32>
    %55 = arith.subf %52, %50 : vector<1x1xf32>
    %56 = tpu.reciprocal %55 {approx = true} : vector<1x1xf32> -> vector<1x1xf32>
    %57 = vector.broadcast %56 : vector<1x1xf32> to vector<1x64xf32>
    %58 = arith.mulf %54, %57 : vector<1x64xf32>
    %59 = arith.index_cast %c1_i32 : i32 to index
    %c0_23 = arith.constant 0 : index
    %c0_24 = arith.constant 0 : index
    %60 = vector.load %arg4[%59, %c0_23, %c0_24] : memref<2x1x64xf32, #tpu.memory_space<vmem>>, vector<1x1x64xf32>
    %61 = vector.shape_cast %60 : vector<1x1x64xf32> to vector<1x64xf32>
    %62 = vector.shape_cast %58 : vector<1x64xf32> to vector<1x1x64xf32>
    tpu.vector_store %arg4[%59, %c0_23, %c0_24], %62 {strides = array<i32>} : memref<2x1x64xf32, #tpu.memory_space<vmem>>, vector<1x1x64xf32>,
    %c2_i32 = arith.constant 2 : i32
    return
  }
  func.func @transform_0(%arg0: i32) -> (i32, i32, i32) {
    %c0_i32 = arith.constant 0 : i32
    %c0_i32_0 = arith.constant 0 : i32
    %c0_i32_1 = arith.constant 0 : i32
    return %arg0, %c0_i32, %c0_i32_0 : i32, i32, i32
  }
  func.func @transform_1(%arg0: i32) -> (i32, i32) {
    %c0_i32 = arith.constant 0 : i32
    %c0_i32_0 = arith.constant 0 : i32
    %c0_i32_1 = arith.constant 0 : i32
    return %c0_i32, %c0_i32_0 : i32, i32
  }
  func.func @transform_2(%arg0: i32) -> (i32, i32, i32) {
    %c0_i32 = arith.constant 0 : i32
    %c0_i32_0 = arith.constant 0 : i32
    %c0_i32_1 = arith.constant 0 : i32
    return %arg0, %c0_i32, %c0_i32_0 : i32, i32, i32
  }
  func.func @transform_3(%arg0: i32) -> (i32, i32, i32) {
    %c0_i32 = arith.constant 0 : i32
    %c0_i32_0 = arith.constant 0 : i32
    %c0_i32_1 = arith.constant 0 : i32
    return %arg0, %c0_i32, %c0_i32_0 : i32, i32, i32
  }
}

</mosaic_0001>

<llo_original>
// kernel: tpu_custom_call.1
$region0: #{tpu_custom_call.1}
  #allocation0 [shape = 'u32[]', space=smem, size = 0x4, offset = 0x4, fixed_abs, tag = 'smem constant byte address 0x4 - core index']
  #allocation1 [shape = 'u32[144,128]{1,0:T(1,128)}', space=vmem, size = 0x12000, scoped, tag = 'internal scratch']
  %s0 = inlined_call_operand.hbm [shape: bf16[4,32,64], index: 0, kind: input, shape index: {}]
  %s1 = inlined_call_operand.hbm [shape: bf16[8,32], index: 1, kind: input, shape index: {}]
  %s2 = inlined_call_operand.hbm [shape: f32[4,8,32], index: 2, kind: output, shape index: {0}]
  %s3 = inlined_call_operand.hbm [shape: f32[4,1,64], index: 3, kind: output, shape index: {1}]
  %4 = xla_tuple %s2, %s3
  %s5 = sld [smem:[#allocation0]]
  $region57: #{tpu_custom_call.1} parent=0
    _
  %s7 = ssub.s32 1, %s5
  %s8 = scalar_select 0, %s7, %s5
  $region1: #{tpu_custom_call.1} parent=0
    #allocation2 [shape = 'u8[32768]{0}', space=vmem, size = 0x8000, scoped, tag = 'input window, operand 0']
    #allocation3 [shape = 's32[2]{0}', space=sflag, size = 0x8, scoped, tag = 'scoped memory for tpu_custom_call.1']
    #allocation4 [shape = 's32[2]{0}', space=sflag, size = 0x8, scoped, tag = 'scoped memory for tpu_custom_call.1']
    #allocation5 [shape = 'u8[2048]{0}', space=vmem, size = 0x800, scoped, tag = 'input window, operand 1, single buffered']
    #allocation6 [shape = 's32[1]{0}', space=sflag, size = 0x4, scoped, tag = 'scoped memory for tpu_custom_call.1']
    #allocation7 [shape = 'u8[16384]{0}', space=vmem, size = 0x4000, scoped, tag = 'output window, operand 0']
    #allocation8 [shape = 'u8[2048]{0}', space=vmem, size = 0x800, scoped, tag = 'output window, operand 1']
    #allocation9 [shape = 's32[2]{0}', space=sflag, size = 0x8, scoped, tag = 'scoped memory for tpu_custom_call.1']
    %9 = vsyncpa [#allocation3], 0
    %s10 = scalar_lea.sflag [#allocation3], 1
    %11 = vsyncpa %s10, 0
    %12 = vsyncpa [#allocation6], 0
    %13 = vsyncpa [#allocation4], 0
    %s14 = scalar_lea.sflag [#allocation4], 1
    %15 = vsyncpa %s14, 0
    %16 = vsyncpa [#allocation9], 0
    %s17 = scalar_lea.sflag [#allocation9], 1
    %18 = vsyncpa %s17, 0
    loop: start=0, step=1, limit=4
    $region2: #{tpu_custom_call.1} parent=1 // loop_pre_header
      _
    $region3: #{tpu_custom_call.1} parent=1 // loop_header
      %s20 = sphi 0, %s24
      %p21 = scmp.ge.s32.totalorder %s20, 4
      %s30 = sphi 0, %s32
      %s33 = sphi 0, %s30
      %s34 = sphi 0, %s33
      %s50 = sphi 0, %s34
      %s54 = sphi 0, %s54
      %s56 = sphi 0, %s54
      %s57 = sphi 0, %s56
      %s71 = sphi 0, %s57
      %s77 = sphi 0, %s79
      %s80 = sphi 0, %s77
      %s81 = sphi 0, %s80
      %s97 = sphi 0, %s81
      %s103 = sphi 0, %s105
      %s106 = sphi 0, %s103
      %s107 = sphi 0, %s106
      %s123 = sphi 0, %s107
    $region4: #{tpu_custom_call.1} parent=1 // loop_header_branch
      %23 = sbr.rel (%p21) target = $region8
    $region5: #{tpu_custom_call.1} parent=1 // loop_body
      %s25 = ssub.s32 %s20, 1
      %s26 = ssub.s32 %s20, 2
      %s27 = sadd.s32 %s20, 1
      %s28 = ssub.s32 %s20, %s27
      %p29 = scmp.eq.s32.totalorder %s28, 0
      %s31 = sadd.s32 %s30, 1
      %s32 = scalar_select %p29, %s30, %s31
      %p35 = pneg %p29
      %p36 = scmp.eq.s32.totalorder %s20, 1
      %p37 = por %p35, %p36
      %p38 = scmp.ne.s32.totalorder %s30, %s33
      %p39 = scmp.eq.s32.totalorder %s20, 0
      %p40 = por %p38, %p39
      %p41 = scmp.ne.s32.totalorder %s30, %s33
      %p42 = scmp.eq.s32.totalorder %s25, 1
      %p43 = por %p41, %p42
      %p44 = scmp.ne.s32.totalorder %s33, %s34
      %p45 = scmp.eq.s32.totalorder %s25, 0
      %p46 = por %p44, %p45
      %p47 = scmp.ne.s32.totalorder %s33, %s34
      %p48 = scmp.eq.s32.totalorder %s26, 1
      %p49 = por %p47, %p48
      %p51 = scmp.ne.s32.totalorder %s34, %s50
      %p52 = scmp.eq.s32.totalorder %s26, 0
      %p53 = por %p51, %p52
      %s55 = sadd.s32 %s54, 1
      %p58 = scmp.eq.s32.totalorder %s20, 1
      %p59 = scmp.ne.s32.totalorder %s54, %s56
      %p60 = scmp.eq.s32.totalorder %s20, 0
      %p61 = por %p59, %p60
      %p62 = scmp.ne.s32.totalorder %s54, %s56
      %p63 = scmp.eq.s32.totalorder %s25, 1
      %p64 = por %p62, %p63
      %p65 = scmp.ne.s32.totalorder %s56, %s57
      %p66 = scmp.eq.s32.totalorder %s25, 0
      %p67 = por %p65, %p66
      %p68 = scmp.ne.s32.totalorder %s56, %s57
      %p69 = scmp.eq.s32.totalorder %s26, 1
      %p70 = por %p68, %p69
      %p72 = scmp.ne.s32.totalorder %s57, %s71
      %p73 = scmp.eq.s32.totalorder %s26, 0
      %p74 = por %p72, %p73
      %s75 = ssub.s32 %s20, %s27
      %p76 = scmp.eq.s32.totalorder %s75, 0
      %s78 = sadd.s32 %s77, 1
      %s79 = scalar_select %p76, %s77, %s78
      %p82 = pneg %p76
      %p83 = scmp.eq.s32.totalorder %s20, 1
      %p84 = por %p82, %p83
      %p85 = scmp.ne.s32.totalorder %s77, %s80
      %p86 = scmp.eq.s32.totalorder %s20, 0
      %p87 = por %p85, %p86
      %p88 = scmp.ne.s32.totalorder %s77, %s80
      %p89 = scmp.eq.s32.totalorder %s25, 1
      %p90 = por %p88, %p89
      %p91 = scmp.ne.s32.totalorder %s80, %s81
      %p92 = scmp.eq.s32.totalorder %s25, 0
      %p93 = por %p91, %p92
      %p94 = scmp.ne.s32.totalorder %s80, %s81
      %p95 = scmp.eq.s32.totalorder %s26, 1
      %p96 = por %p94, %p95
      %p98 = scmp.ne.s32.totalorder %s81, %s97
      %p99 = scmp.eq.s32.totalorder %s26, 0
      %p100 = por %p98, %p99
      %s101 = ssub.s32 %s20, %s27
      %p102 = scmp.eq.s32.totalorder %s101, 0
      %s104 = sadd.s32 %s103, 1
      %s105 = scalar_select %p102, %s103, %s104
      %p108 = pneg %p102
      %p109 = scmp.eq.s32.totalorder %s20, 1
      %p110 = por %p108, %p109
      %p111 = scmp.ne.s32.totalorder %s103, %s106
      %p112 = scmp.eq.s32.totalorder %s20, 0
      %p113 = por %p111, %p112
      %p114 = scmp.ne.s32.totalorder %s103, %s106
      %p115 = scmp.eq.s32.totalorder %s25, 1
      %p116 = por %p114, %p115
      %p117 = scmp.ne.s32.totalorder %s106, %s107
      %p118 = scmp.eq.s32.totalorder %s25, 0
      %p119 = por %p117, %p118
      %p120 = scmp.ne.s32.totalorder %s106, %s107
      %p121 = scmp.eq.s32.totalorder %s26, 1
      %p122 = por %p120, %p121
      %p124 = scmp.ne.s32.totalorder %s107, %s123
      %p125 = scmp.eq.s32.totalorder %s26, 0
      %p126 = por %p124, %p125
      %p127 = scmp.le.s32.totalorder 1, %s20
      %p128 = scmp.lt.s32.totalorder %s20, 3
      %p129 = pnand %p127, %p128
      %p130 = pneg %p129
      // Predicated region
      $region9: #{tpu_custom_call.1} parent=5 // pred_check
        _
      $region10: #{tpu_custom_call.1} parent=5 // pred_check_branch
        %132 = sbr.rel (%p129) target = $region12
      $region11: #{tpu_custom_call.1} parent=5 // pred_region
        %s133 = ssub.s32 %s20, 1
        // Predicated region
        $region13: #{tpu_custom_call.1} parent=11 // pred_check
          %p134 = pneg %p67
        $region14: #{tpu_custom_call.1} parent=11 // pred_check_branch
          %136 = sbr.rel (%p134) target = $region16
        $region15: #{tpu_custom_call.1} parent=11 // pred_region
          %s138 = ssub.s32 64, 64
          %139 = vsyncadd [#allocation6], %s138
          %s141 = sshll.u32 [#allocation5], 4
          %s142 = int_to_ptr.vmem [resolvable:$true] %s141
          %144 = dma.hbm_to_vmem [thread:$0]  %s1, 64, %s142, [#allocation6]
        $region16: #{tpu_custom_call.1} parent=11 // pred_fallthru
          _
      $region12: #{tpu_custom_call.1} parent=5 // pred_fallthru
        _
      %p145 = scmp.lt.s32.totalorder %s20, 2
      // Predicated region
      $region17: #{tpu_custom_call.1} parent=5 // pred_check
        %p146 = pneg %p145
      $region18: #{tpu_custom_call.1} parent=5 // pred_check_branch
        %148 = sbr.rel (%p146) target = $region20
      $region19: #{tpu_custom_call.1} parent=5 // pred_region
        // Predicated region
        $region21: #{tpu_custom_call.1} parent=19 // pred_check
          %p149 = pneg %p40
        $region22: #{tpu_custom_call.1} parent=19 // pred_check_branch
          %151 = sbr.rel (%p149) target = $region24
        $region23: #{tpu_custom_call.1} parent=19 // pred_region
          %s152 = sand.u32 %s30, 1
          %s153 = scalar_lea.sflag [#allocation3], %s152
          %s154 = sand.u32 %s30, 1
          %s155 = smul.addr %s154, 32
          %s156 = scalar_lea.vmem [#allocation2], %s155
          %s157 = smul.u32 2, %s20
          %s159 = ssub.s32 512, 512
          %160 = vsyncadd %s153, %s159
          %s161 = smul.addr %s157, 4
          %s162 = smul.addr %s161, 64
          %s163 = scalar_lea.hbm %s0, %s162
          %s164 = sshll.u32 %s156, 4
          %s165 = int_to_ptr.vmem [resolvable:$true] %s164
          %170 = dma.hbm_to_vmem [thread:$0]  %s163, 512, %s165, %s153, 64, 64, 4
        $region24: #{tpu_custom_call.1} parent=19 // pred_fallthru
          _
      $region20: #{tpu_custom_call.1} parent=5 // pred_fallthru
        _
      %p171 = scmp.le.s32.totalorder 1, %s20
      %p172 = scmp.lt.s32.totalorder %s20, 3
      %p173 = pnand %p171, %p172
      %p174 = pneg %p173
      // Predicated region
      $region25: #{tpu_custom_call.1} parent=5 // pred_check
        _
      $region26: #{tpu_custom_call.1} parent=5 // pred_check_branch
        %176 = sbr.rel (%p173) target = $region28
      $region27: #{tpu_custom_call.1} parent=5 // pred_region
        %s177 = ssub.s32 %s20, 1
        %s178 = sand.u32 %s33, 1
        %s179 = scalar_lea.sflag [#allocation3], %s178
        %s180 = sand.u32 %s33, 1
        %s181 = smul.addr %s180, 32
        %s182 = scalar_lea.vmem [#allocation2], %s181
        // Predicated region
        $region29: #{tpu_custom_call.1} parent=27 // pred_check
          %p183 = pneg %p46
        $region30: #{tpu_custom_call.1} parent=27 // pred_check_branch
          %185 = sbr.rel (%p183) target = $region32
        $region31: #{tpu_custom_call.1} parent=27 // pred_region
          %186 = dma.done %s179, 512
        $region32: #{tpu_custom_call.1} parent=27 // pred_fallthru
          _
        // Predicated region
        $region33: #{tpu_custom_call.1} parent=27 // pred_check
          %p187 = pneg %p67
        $region34: #{tpu_custom_call.1} parent=27 // pred_check_branch
          %189 = sbr.rel (%p187) target = $region36
        $region35: #{tpu_custom_call.1} parent=27 // pred_region
          %190 = dma.done [#allocation6], 64
        $region36: #{tpu_custom_call.1} parent=27 // pred_fallthru
          _
        %s191 = sand.u32 %s33, 1
        %s192 = scalar_lea.sflag [#allocation3], %s191
        %s193 = sand.u32 %s33, 1
        %s194 = smul.addr %s193, 32
        %s195 = scalar_lea.vmem [#allocation2], %s194
        %p196 = pneg %p46
        %p197 = pneg %p43
        %p198 = pneg %p67
        %p199 = pneg %p64
        %p200 = pneg %p93
        %p201 = pneg %p90
        %s202 = sand.u32 %s80, 1
        %s203 = scalar_lea.sflag [#allocation4], %s202
        %s204 = sand.u32 %s80, 1
        %s205 = smul.addr %s204, 16
        %s206 = scalar_lea.vmem [#allocation7], %s205
        %p207 = pneg %p119
        %p208 = pneg %p116
        %s209 = sand.u32 %s106, 1
        %s210 = scalar_lea.sflag [#allocation9], %s209
        %s211 = sand.u32 %s106, 1
        %s212 = smul.addr %s211, 2
        %s213 = scalar_lea.vmem [#allocation8], %s212
        %s214 = smul.u32 2, %s25
        %s215 = smul.u32 2, %s25
        %s216 = smul.u32 2, %s25
        %v218 = vld [vmem:[#allocation5] sm:$0xf]
        %v219 = vld [vmem:[%s182] sm:$0xf]
        %v220 = vld [vmem:[%s182 + $0x4] sm:$0xf]
        %v221 = vld [vmem:[%s182 + $0x8] sm:$0xf]
        %v222 = vld [vmem:[%s182 + $0xc] sm:$0xf]
        %v227 = vunpack.c.l.b16 %v219
        %v228 = vunpack.c.l.b16 %v220
        %v229 = vunpack.c.l.b16 %v221
        %v230 = vunpack.c.l.b16 %v222
        %v231 = vpack.c.b16 %v228, %v227
        %v232 = vpack.c.b16 %v230, %v229
        %vm235 = vcmask 261120
        %v237 = vsel %vm235, %v218, 0
        %239 = vmatprep.subr.bf16.mxu0 0
        %240 = vmatpush1.bf16.msra.mxu0 %v231
        %241 = vmatprep.subr.bf16.mxu0 0
        %242 = vmatpush1.bf16.msra.mxu0 %v232
        %243 = vmatprep.subr.bf16.mxu0 0
        %244 = vmatpush1.bf16.msra.mxu0 0
        %245 = vmatprep.subr.bf16.mxu0 0
        %246 = vmatpush1.bf16.msra.mxu0 0
        %247 = vmatprep.subr.bf16.mxu0 0
        %248 = vmatpush1.bf16.msra.mxu0 0
        %249 = vmatprep.subr.bf16.mxu0 0
        %250 = vmatpush1.bf16.msra.mxu0 0
        %251 = vmatprep.subr.bf16.mxu0 0
        %252 = vmatpush1.bf16.msra.mxu0 0
        %253 = vmatprep.subr.bf16.mxu0 0
        %254 = vmatpush1.bf16.msra.mxu0 0
        %255 = vmatprep.subr.bf16.mxu0 0
        %256 = vmatpush1.bf16.msra.mxu0 0
        %257 = vmatprep.subr.bf16.mxu0 0
        %258 = vmatpush1.bf16.msra.mxu0 0
        %259 = vmatprep.subr.bf16.mxu0 0
        %260 = vmatpush1.bf16.msra.mxu0 0
        %261 = vmatprep.subr.bf16.mxu0 0
        %262 = vmatpush1.bf16.msra.mxu0 0
        %263 = vmatprep.subr.bf16.mxu0 0
        %264 = vmatpush1.bf16.msra.mxu0 0
        %265 = vmatprep.subr.bf16.mxu0 0
        %266 = vmatpush1.bf16.msra.mxu0 0
        %267 = vmatprep.subr.bf16.mxu0 0
        %268 = vmatpush1.bf16.msra.mxu0 0
        %269 = vmatprep.subr.bf16.mxu0 0
        %270 = vmatpush1.bf16.msra.mxu0 0
        %271 = vmatprep.mubr.bf16.mxu0 0
        %272 = vmatmul.mubr.bf16.gmra.mrb[0].mxu0 %v237
        %v273 = vpop.f32.mrb[0].mxu0
        %v274 = vadd.f32 0.0, %v273
        %v275 = vpop.f32.mrb[0].mxu0
        %v276 = vpop.f32.mrb[0].mxu0
        %v277 = vpop.f32.mrb[0].mxu0
        %278 = vdwg.mxu0
        %v279 = vpack.c.bf16 %v274, %v274
        %vm280 = vcmask 523264
        %v282 = vsel %vm280, %v231, 0
        %v285 = vsel %vm280, %v232, 0
        %v288 = vsel %vm280, %v279, 0
        %290 = vmatprep.subr.bf16.mxu0 0
        %291 = vmatpush1.bf16.xpose.msra.mxu0 %v288
        %292 = vmatprep.subr.bf16.mxu0 0
        %293 = vmatpush1.bf16.xpose.msra.mxu0 0
        %294 = vmatprep.subr.bf16.mxu0 0
        %295 = vmatpush1.bf16.xpose.msra.mxu0 0
        %296 = vmatprep.subr.bf16.mxu0 0
        %297 = vmatpush1.bf16.xpose.msra.mxu0 0
        %298 = vmatprep.subr.bf16.mxu0 0
        %299 = vmatpush1.bf16.xpose.msra.mxu0 0
        %300 = vmatprep.subr.bf16.mxu0 0
        %301 = vmatpush1.bf16.xpose.msra.mxu0 0
        %302 = vmatprep.subr.bf16.mxu0 0
        %303 = vmatpush1.bf16.xpose.msra.mxu0 0
        %304 = vmatprep.subr.bf16.mxu0 0
        %305 = vmatpush1.bf16.xpose.msra.mxu0 0
        %306 = vmatprep.subr.bf16.mxu0 0
        %307 = vmatpush1.bf16.xpose.msra.mxu0 0
        %308 = vmatprep.subr.bf16.mxu0 0
        %309 = vmatpush1.bf16.xpose.msra.mxu0 0
        %310 = vmatprep.subr.bf16.mxu0 0
        %311 = vmatpush1.bf16.xpose.msra.mxu0 0
        %312 = vmatprep.subr.bf16.mxu0 0
        %313 = vmatpush1.bf16.xpose.msra.mxu0 0
        %314 = vmatprep.subr.bf16.mxu0 0
        %315 = vmatpush1.bf16.xpose.msra.mxu0 0
        %316 = vmatprep.subr.bf16.mxu0 0
        %317 = vmatpush1.bf16.xpose.msra.mxu0 0
        %318 = vmatprep.subr.bf16.mxu0 0
        %319 = vmatpush1.bf16.xpose.msra.mxu0 0
        %320 = vmatprep.subr.bf16.mxu0 0
        %321 = vmatpush1.bf16.xpose.msra.mxu0 0
        %322 = vmatprep.mubr.bf16.mxu0 0
        %323 = vmatmul.mubr.bf16.gmra.mrb[0].mxu0 %v282
        %v324 = vpop.f32.mrb[0].mxu0
        %v325 = vadd.f32 0.0, %v324
        %v326 = vpop.f32.mrb[0].mxu0
        %v327 = vpop.f32.mrb[0].mxu0
        %v328 = vadd.f32 0.0, %v327
        %v329 = vpop.f32.mrb[0].mxu0
        %330 = vmatprep.mubr.bf16.mxu0 0
        %331 = vmatmul.mubr.bf16.gmra.mrb[0].mxu0 %v285
        %v332 = vpop.f32.mrb[0].mxu0
        %v333 = vadd.f32 0.0, %v332
        %v334 = vpop.f32.mrb[0].mxu0
        %v335 = vpop.f32.mrb[0].mxu0
        %v336 = vadd.f32 0.0, %v335
        %v337 = vpop.f32.mrb[0].mxu0
        %338 = vdwg.mxu0
        %339 = vxpose.xlu0.b32.start [1/16] %v325, 128
        %340 = vxpose.xlu0.b32.cont [2/16] %v328, 128
        %341 = vxpose.xlu0.b32.cont [3/16] %v333, 128
        %342 = vxpose.xlu0.b32.cont [4/16] %v336, 128
        %343 = vxpose.xlu0.b32.cont [5/16] 0.0, 128
        %344 = vxpose.xlu0.b32.cont [6/16] 0.0, 128
        %345 = vxpose.xlu0.b32.cont [7/16] 0.0, 128
        %346 = vxpose.xlu0.b32.cont [8/16] 0.0, 128
        %347 = vxpose.xlu0.b32.cont [9/16] 0.0, 128
        %348 = vxpose.xlu0.b32.cont [10/16] 0.0, 128
        %349 = vxpose.xlu0.b32.cont [11/16] 0.0, 128
        %350 = vxpose.xlu0.b32.cont [12/16] 0.0, 128
        %351 = vxpose.xlu0.b32.cont [13/16] 0.0, 128
        %352 = vxpose.xlu0.b32.cont [14/16] 0.0, 128
        %353 = vxpose.xlu0.b32.cont [15/16] 0.0, 128
        %354 = vxpose.xlu0.b32.end [16/16] 0.0, 128
        %v355 = vpop.trf.xlu0
        %v356 = vpop.trf.xlu0
        %v357 = vpop.trf.xlu0
        %v358 = vpop.trf.xlu0
        %v359 = vpop.trf.xlu0
        %v360 = vpop.trf.xlu0
        %v361 = vpop.trf.xlu0
        %v362 = vpop.trf.xlu0
        %v363 = vpop.trf.xlu0
        %v364 = vpop.trf.xlu0
        %v365 = vpop.trf.xlu0
        %v366 = vpop.trf.xlu0
        %v367 = vpop.trf.xlu0
        %v368 = vpop.trf.xlu0
        %v369 = vpop.trf.xlu0
        %v370 = vpop.trf.xlu0
        %v371 = vmul.f32 %v355, 0.015625
        %372 = vst.msk [vmem:[%s206] sm:$0xff] %vm235, %v371
        %v373 = vsel %vm280, %v274, 0.0
        %v374 = vrot.slane %v373, 4
        %v375 = vadd.f32 %v373, %v374
        %v376 = vrot.slane %v375, 2
        %v377 = vadd.f32 %v375, %v376
        %v378 = vrot.slane %v377, 1
        %v379 = vadd.f32 %v377, %v378
        %v380 = vrcp.pop 8.0
        %v381 = vmul.f32 %v379, %v380
        %v382 = vsel %vm280, %v381, inf
        %383 = vmin.xlane.f32.xlu0 %v382
        %v384 = vpop.xlane.xlu0 %383
        %v385 = vsel %vm280, %v381, -inf
        %386 = vmax.xlane.f32.xlu0 %v385
        %v387 = vpop.xlane.xlu0 %386
        %v388 = vsub.f32 %v381, %v384
        %v389 = vsub.f32 %v387, %v384
        %v390 = vrcp.pop %v389
        %v391 = vmul.f32 %v388, %v390
        %vm392 = vcmask 516096
        %393 = vst.msk [vmem:[%s213] sm:$0x1] %vm392, %v391
        %s394 = scalar_lea.vmem %s182, 16 [#allocation2]
        %v395 = vld [vmem:[%s394] sm:$0xf]
        %v396 = vld [vmem:[%s394 + $0x4] sm:$0xf]
        %v397 = vld [vmem:[%s394 + $0x8] sm:$0xf]
        %v398 = vld [vmem:[%s394 + $0xc] sm:$0xf]
        %v403 = vunpack.c.l.b16 %v395
        %v404 = vunpack.c.l.b16 %v396
        %v405 = vunpack.c.l.b16 %v397
        %v406 = vunpack.c.l.b16 %v398
        %v407 = vpack.c.b16 %v404, %v403
        %v408 = vpack.c.b16 %v406, %v405
        %411 = vmatprep.subr.bf16.mxu0 0
        %412 = vmatpush1.bf16.msra.mxu0 %v407
        %413 = vmatprep.subr.bf16.mxu0 0
        %414 = vmatpush1.bf16.msra.mxu0 %v408
        %415 = vmatprep.subr.bf16.mxu0 0
        %416 = vmatpush1.bf16.msra.mxu0 0
        %417 = vmatprep.subr.bf16.mxu0 0
        %418 = vmatpush1.bf16.msra.mxu0 0
        %419 = vmatprep.subr.bf16.mxu0 0
        %420 = vmatpush1.bf16.msra.mxu0 0
        %421 = vmatprep.subr.bf16.mxu0 0
        %422 = vmatpush1.bf16.msra.mxu0 0
        %423 = vmatprep.subr.bf16.mxu0 0
        %424 = vmatpush1.bf16.msra.mxu0 0
        %425 = vmatprep.subr.bf16.mxu0 0
        %426 = vmatpush1.bf16.msra.mxu0 0
        %427 = vmatprep.subr.bf16.mxu0 0
        %428 = vmatpush1.bf16.msra.mxu0 0
        %429 = vmatprep.subr.bf16.mxu0 0
        %430 = vmatpush1.bf16.msra.mxu0 0
        %431 = vmatprep.subr.bf16.mxu0 0
        %432 = vmatpush1.bf16.msra.mxu0 0
        %433 = vmatprep.subr.bf16.mxu0 0
        %434 = vmatpush1.bf16.msra.mxu0 0
        %435 = vmatprep.subr.bf16.mxu0 0
        %436 = vmatpush1.bf16.msra.mxu0 0
        %437 = vmatprep.subr.bf16.mxu0 0
        %438 = vmatpush1.bf16.msra.mxu0 0
        %439 = vmatprep.subr.bf16.mxu0 0
        %440 = vmatpush1.bf16.msra.mxu0 0
        %441 = vmatprep.subr.bf16.mxu0 0
        %442 = vmatpush1.bf16.msra.mxu0 0
        %443 = vmatprep.mubr.bf16.mxu0 0
        %444 = vmatmul.mubr.bf16.gmra.mrb[0].mxu0 %v237
        %v445 = vpop.f32.mrb[0].mxu0
        %v446 = vadd.f32 0.0, %v445
        %v447 = vpop.f32.mrb[0].mxu0
        %v448 = vpop.f32.mrb[0].mxu0
        %v449 = vpop.f32.mrb[0].mxu0
        %450 = vdwg.mxu0
        %v451 = vpack.c.bf16 %v446, %v446
        %v453 = vsel %vm280, %v407, 0
        %v456 = vsel %vm280, %v408, 0
        %v459 = vsel %vm280, %v451, 0
        %461 = vmatprep.subr.bf16.mxu0 0
        %462 = vmatpush1.bf16.xpose.msra.mxu0 %v459
        %463 = vmatprep.subr.bf16.mxu0 0
        %464 = vmatpush1.bf16.xpose.msra.mxu0 0
        %465 = vmatprep.subr.bf16.mxu0 0
        %466 = vmatpush1.bf16.xpose.msra.mxu0 0
        %467 = vmatprep.subr.bf16.mxu0 0
        %468 = vmatpush1.bf16.xpose.msra.mxu0 0
        %469 = vmatprep.subr.bf16.mxu0 0
        %470 = vmatpush1.bf16.xpose.msra.mxu0 0
        %471 = vmatprep.subr.bf16.mxu0 0
        %472 = vmatpush1.bf16.xpose.msra.mxu0 0
        %473 = vmatprep.subr.bf16.mxu0 0
        %474 = vmatpush1.bf16.xpose.msra.mxu0 0
        %475 = vmatprep.subr.bf16.mxu0 0
        %476 = vmatpush1.bf16.xpose.msra.mxu0 0
        %477 = vmatprep.subr.bf16.mxu0 0
        %478 = vmatpush1.bf16.xpose.msra.mxu0 0
        %479 = vmatprep.subr.bf16.mxu0 0
        %480 = vmatpush1.bf16.xpose.msra.mxu0 0
        %481 = vmatprep.subr.bf16.mxu0 0
        %482 = vmatpush1.bf16.xpose.msra.mxu0 0
        %483 = vmatprep.subr.bf16.mxu0 0
        %484 = vmatpush1.bf16.xpose.msra.mxu0 0
        %485 = vmatprep.subr.bf16.mxu0 0
        %486 = vmatpush1.bf16.xpose.msra.mxu0 0
        %487 = vmatprep.subr.bf16.mxu0 0
        %488 = vmatpush1.bf16.xpose.msra.mxu0 0
        %489 = vmatprep.subr.bf16.mxu0 0
        %490 = vmatpush1.bf16.xpose.msra.mxu0 0
        %491 = vmatprep.subr.bf16.mxu0 0
        %492 = vmatpush1.bf16.xpose.msra.mxu0 0
        %493 = vmatprep.mubr.bf16.mxu0 0
        %494 = vmatmul.mubr.bf16.gmra.mrb[0].mxu0 %v453
        %v495 = vpop.f32.mrb[0].mxu0
        %v496 = vadd.f32 0.0, %v495
        %v497 = vpop.f32.mrb[0].mxu0
        %v498 = vpop.f32.mrb[0].mxu0
        %v499 = vadd.f32 0.0, %v498
        %v500 = vpop.f32.mrb[0].mxu0
        %501 = vmatprep.mubr.bf16.mxu0 0
        %502 = vmatmul.mubr.bf16.gmra.mrb[0].mxu0 %v456
        %v503 = vpop.f32.mrb[0].mxu0
        %v504 = vadd.f32 0.0, %v503
        %v505 = vpop.f32.mrb[0].mxu0
        %v506 = vpop.f32.mrb[0].mxu0
        %v507 = vadd.f32 0.0, %v506
        %v508 = vpop.f32.mrb[0].mxu0
        %509 = vdwg.mxu0
        %510 = vxpose.xlu0.b32.start [1/16] %v496, 128
        %511 = vxpose.xlu0.b32.cont [2/16] %v499, 128
        %512 = vxpose.xlu0.b32.cont [3/16] %v504, 128
        %513 = vxpose.xlu0.b32.cont [4/16] %v507, 128
        %514 = vxpose.xlu0.b32.cont [5/16] 0.0, 128
        %515 = vxpose.xlu0.b32.cont [6/16] 0.0, 128
        %516 = vxpose.xlu0.b32.cont [7/16] 0.0, 128
        %517 = vxpose.xlu0.b32.cont [8/16] 0.0, 128
        %518 = vxpose.xlu0.b32.cont [9/16] 0.0, 128
        %519 = vxpose.xlu0.b32.cont [10/16] 0.0, 128
        %520 = vxpose.xlu0.b32.cont [11/16] 0.0, 128
        %521 = vxpose.xlu0.b32.cont [12/16] 0.0, 128
        %522 = vxpose.xlu0.b32.cont [13/16] 0.0, 128
        %523 = vxpose.xlu0.b32.cont [14/16] 0.0, 128
        %524 = vxpose.xlu0.b32.cont [15/16] 0.0, 128
        %525 = vxpose.xlu0.b32.end [16/16] 0.0, 128
        %v526 = vpop.trf.xlu0
        %v527 = vpop.trf.xlu0
        %v528 = vpop.trf.xlu0
        %v529 = vpop.trf.xlu0
        %v530 = vpop.trf.xlu0
        %v531 = vpop.trf.xlu0
        %v532 = vpop.trf.xlu0
        %v533 = vpop.trf.xlu0
        %v534 = vpop.trf.xlu0
        %v535 = vpop.trf.xlu0
        %v536 = vpop.trf.xlu0
        %v537 = vpop.trf.xlu0
        %v538 = vpop.trf.xlu0
        %v539 = vpop.trf.xlu0
        %v540 = vpop.trf.xlu0
        %v541 = vpop.trf.xlu0
        %v542 = vmul.f32 %v526, 0.015625
        %s543 = scalar_lea.vmem %s206, 8 [#allocation7]
        %544 = vst.msk [vmem:[%s543] sm:$0xff] %vm235, %v542
        %v545 = vsel %vm280, %v446, 0.0
        %v546 = vrot.slane %v545, 4
        %v547 = vadd.f32 %v545, %v546
        %v548 = vrot.slane %v547, 2
        %v549 = vadd.f32 %v547, %v548
        %v550 = vrot.slane %v549, 1
        %v551 = vadd.f32 %v549, %v550
        %v552 = vmul.f32 %v551, %v380
        %v553 = vsel %vm280, %v552, inf
        %554 = vmin.xlane.f32.xlu0 %v553
        %v555 = vpop.xlane.xlu0 %554
        %v556 = vsel %vm280, %v552, -inf
        %557 = vmax.xlane.f32.xlu0 %v556
        %v558 = vpop.xlane.xlu0 %557
        %v559 = vsub.f32 %v552, %v555
        %v560 = vsub.f32 %v558, %v555
        %v561 = vrcp.pop %v560
        %v562 = vmul.f32 %v559, %v561
        %s563 = scalar_lea.vmem %s213, 1 [#allocation8]
        %564 = vst.msk [vmem:[%s563] sm:$0x1] %vm392, %v562
        %s565 = sand.u32 %s80, 1
        %s566 = scalar_lea.sflag [#allocation4], %s565
        %s567 = sand.u32 %s80, 1
        %s568 = smul.addr %s567, 16
        %s569 = scalar_lea.vmem [#allocation7], %s568
        %s570 = sand.u32 %s106, 1
        %s571 = scalar_lea.sflag [#allocation9], %s570
        %s572 = sand.u32 %s106, 1
        %s573 = smul.addr %s572, 2
        %s574 = scalar_lea.vmem [#allocation8], %s573
        // Predicated region
        $region37: #{tpu_custom_call.1} parent=27 // pred_check
          %p575 = pneg %p90
        $region38: #{tpu_custom_call.1} parent=27 // pred_check_branch
          %577 = sbr.rel (%p575) target = $region40
        $region39: #{tpu_custom_call.1} parent=27 // pred_region
          %s578 = smul.u32 2, %s25
          %s580 = ssub.s32 256, 256
          %581 = vsyncadd %s566, %s580
          %s582 = smul.addr %s578, 128
          %s583 = scalar_lea.hbm %s2, %s582
          %s584 = sshll.u32 %s569, 4
          %s585 = int_to_ptr.vmem [resolvable:$true] %s584
          %590 = dma.vmem_to_hbm [thread:$0]  %s585, 256, %s583, %s566, 128, 128, 8
        $region40: #{tpu_custom_call.1} parent=27 // pred_fallthru
          _
        // Predicated region
        $region41: #{tpu_custom_call.1} parent=27 // pred_check
          %p591 = pneg %p116
        $region42: #{tpu_custom_call.1} parent=27 // pred_check_branch
          %593 = sbr.rel (%p591) target = $region44
        $region43: #{tpu_custom_call.1} parent=27 // pred_region
          %s594 = smul.u32 2, %s25
          %s596 = ssub.s32 32, 32
          %597 = vsyncadd %s571, %s596
          %s598 = smul.addr %s594, 16
          %s599 = scalar_lea.hbm %s3, %s598
          %s600 = sshll.u32 %s574, 4
          %s601 = int_to_ptr.vmem [resolvable:$true] %s600
          %606 = dma.vmem_to_hbm [thread:$0]  %s601, 32, %s599, %s571, 16, 16, 1
        $region44: #{tpu_custom_call.1} parent=27 // pred_fallthru
          _
      $region28: #{tpu_custom_call.1} parent=5 // pred_fallthru
        _
      %p607 = scmp.le.s32.totalorder 2, %s20
      // Predicated region
      $region45: #{tpu_custom_call.1} parent=5 // pred_check
        %p608 = pneg %p607
      $region46: #{tpu_custom_call.1} parent=5 // pred_check_branch
        %610 = sbr.rel (%p608) target = $region48
      $region47: #{tpu_custom_call.1} parent=5 // pred_region
        %s611 = ssub.s32 %s20, 2
        // Predicated region
        $region49: #{tpu_custom_call.1} parent=47 // pred_check
          %p612 = pneg %p96
        $region50: #{tpu_custom_call.1} parent=47 // pred_check_branch
          %614 = sbr.rel (%p612) target = $region52
        $region51: #{tpu_custom_call.1} parent=47 // pred_region
          %s615 = sand.u32 %s81, 1
          %s616 = scalar_lea.sflag [#allocation4], %s615
          %s617 = sand.u32 %s81, 1
          %s618 = smul.addr %s617, 16
          %s619 = scalar_lea.vmem [#allocation7], %s618
          %620 = dma.done %s616, 256
        $region52: #{tpu_custom_call.1} parent=47 // pred_fallthru
          _
        // Predicated region
        $region53: #{tpu_custom_call.1} parent=47 // pred_check
          %p621 = pneg %p122
        $region54: #{tpu_custom_call.1} parent=47 // pred_check_branch
          %623 = sbr.rel (%p621) target = $region56
        $region55: #{tpu_custom_call.1} parent=47 // pred_region
          %s624 = sand.u32 %s107, 1
          %s625 = scalar_lea.sflag [#allocation9], %s624
          %s626 = sand.u32 %s107, 1
          %s627 = smul.addr %s626, 2
          %s628 = scalar_lea.vmem [#allocation8], %s627
          %629 = dma.done %s625, 32
        $region56: #{tpu_custom_call.1} parent=47 // pred_fallthru
          _
      $region48: #{tpu_custom_call.1} parent=5 // pred_fallthru
        _
    $region6: #{tpu_custom_call.1} parent=1 // loop_footer
      %s24 = sadd.s32 1, %s20
    $region7: #{tpu_custom_call.1} parent=1 // loop_footer_branch
      %19 = sbr.rel target = $region3
    $region8: #{tpu_custom_call.1} parent=1 // loop_exit
      _
    %630 = vsyncpa [#allocation3], 1
    %s631 = scalar_lea.sflag [#allocation3], 1
    %632 = vsyncpa %s631, 1
    %633 = vsyncpa [#allocation6], 1
    %634 = vsyncpa [#allocation4], 1
    %s635 = scalar_lea.sflag [#allocation4], 1
    %636 = vsyncpa %s635, 1
    %637 = vsyncpa [#allocation9], 1
    %s638 = scalar_lea.sflag [#allocation9], 1
    %639 = vsyncpa %s638, 1

</llo_original>
